<compile_context>
chip_gen: v6e
topology: v6e:2x2x1
jax: 0.10.0
libtpu: 0.0.40
codegen_flags: <defaults>
</compile_context>

<pallas_src>
import math
import functools

import jax
import jax.numpy as jnp
import numpy as np
from jax.experimental import pallas as pl
from jax.experimental.pallas import tpu as pltpu


# ---------------------------------------------------------------------------
# Kernel A: per-batch packed K/V projection (one MXU matmul per tensor).
# ---------------------------------------------------------------------------
def _kv_proj_kernel(k_ref, v_ref, wk_ref, wv_ref, kp_ref, vp_ref):
    k = k_ref[0].astype(jnp.bfloat16)      # (Sk, d_model)
    v = v_ref[0].astype(jnp.bfloat16)      # (Sk, d_model)
    kp = jnp.dot(k, wk_ref[...], preferred_element_type=jnp.float32)
    vp = jnp.dot(v, wv_ref[...], preferred_element_type=jnp.float32)
    kp_ref[0] = kp.astype(jnp.bfloat16)    # (Sk, H*d_k)  lane-dense
    vp_ref[0] = vp.astype(jnp.bfloat16)    # (Sk, H*d_v)  lane-dense


# ---------------------------------------------------------------------------
# Kernel B: fused Q projection + attention + output proj + residual + LN.
# ---------------------------------------------------------------------------
def _attn_kernel(q_ref, kp_ref, vp_ref, mask_ref, wq_ref, wfc_ref,
                 gamma_ref, beta_ref, out_ref, *attn_refs,
                 n_heads, d_k, d_v, eps, return_attn, attn_dtype):
    q_f32 = q_ref[0]                                   # (TQ, d_model) f32 (residual)
    q_bf = q_f32.astype(jnp.bfloat16)

    # Packed Q projection fills the MXU N dimension; 1/sqrt(d_k) already folded
    # into wq on the host.
    qp = jnp.dot(q_bf, wq_ref[...],
                 preferred_element_type=jnp.float32).astype(jnp.bfloat16)  # (TQ, H*d_k)

    kp = kp_ref[0]                                     # (Sk, H*d_k) bf16
    vp = vp_ref[0]                                     # (Sk, H*d_v) bf16
    masked = mask_ref[0] > 0.5                         # (TQ, Sk) bool; True == masked

    out = q_f32                                        # f32 accumulator, starts at residual
    for h in range(n_heads):                           # static unroll: one live (TQ,Sk) temp
        qh = qp[:, h * d_k:(h + 1) * d_k]              # (TQ, d_k) bf16
        kh = kp[:, h * d_k:(h + 1) * d_k]              # (Sk, d_k) bf16
        vh = vp[:, h * d_v:(h + 1) * d_v]              # (Sk, d_v) bf16

        # scores = qh @ kh.T without materializing a transpose.
        s = jax.lax.dot_general(qh, kh, (((1,), (1,)), ((), ())),
                                preferred_element_type=jnp.float32)        # (TQ, Sk) f32
        # masked_fill semantics of the reference (replace, not add): fully
        # masked rows come out uniform, exactly like the PyTorch module.
        s = jnp.where(masked, -1e9, s)

        # Numerically stable softmax over the key axis (f32).
        m = jnp.max(s, axis=-1, keepdims=True)
        e = jnp.exp(s - m)
        denom = jnp.sum(e, axis=-1, keepdims=True)
        if return_attn:
            p = e / denom                              # exact: rows sum to ~1
            attn_refs[0][0, h] = p.astype(attn_dtype)
        else:
            p = e * pl.reciprocal(denom, approx=True)  # EUP slot, nearly free

        # Context + per-head output projection accumulated on the MXU.
        ctx = jnp.dot(p.astype(jnp.bfloat16), vh,
                      preferred_element_type=jnp.float32)                  # (TQ, d_v)
        out = out + jnp.dot(ctx.astype(jnp.bfloat16), wfc_ref[h],
                            preferred_element_type=jnp.float32)            # (TQ, d_model)

    # LayerNorm over d_model (biased variance, like torch.nn.LayerNorm).
    mean = jnp.mean(out, axis=-1, keepdims=True)
    var = jnp.mean((out - mean) ** 2, axis=-1, keepdims=True)
    normed = (out - mean) * jax.lax.rsqrt(var + eps)
    out_ref[0] = normed * gamma_ref[0] + beta_ref[0]


def _pick_q_tile(s, target):
    """Largest divisor of s that is <= target and a multiple of 8 (or s itself)."""
    if s <= target:
        return s
    for t in range(target, 7, -1):
        if s % t == 0 and t % 8 == 0:
            return t
    return s


def _vmem_and_tile():
    """Generation-aware (vmem_limit_bytes, q-tile target)."""
    try:
        cap = int(pltpu.get_tpu_info().vmem_capacity_bytes)
    except Exception:
        return 32 * 1024 * 1024, 256
    if cap >= 128 * 1024 * 1024:        # v5e / v6e class
        return 80 * 1024 * 1024, 256
    if cap >= 64 * 1024 * 1024:         # v7x class: leave headroom under 64 MiB
        return 44 * 1024 * 1024, 128
    return 32 * 1024 * 1024, 128


def multi_head_attention(q, k, v, mask, params, *, n_heads, d_k, d_v,
                         eps=1e-5, return_attn=True, attn_dtype=jnp.bfloat16):
    """q,k,v: (B,S,d_model)/(B,Sk,d_model) f32; mask: (B,S,Sk) f32 (>0.5 masked)."""
    B, S, d_model = q.shape
    Sk = k.shape[1]
    wq, wk, wv, wfc, gamma, beta = params

    # Host-side (free) weight re-layout + bf16 cast; 1/sqrt(d_k) folded into W_Q.
    scale = 1.0 / math.sqrt(d_k)
    wq_p = (wq * scale).astype(jnp.bfloat16)                     # (d_model, H*d_k)
    wk_p = wk.astype(jnp.bfloat16)                               # (d_model, H*d_k)
    wv_p = wv.astype(jnp.bfloat16)                               # (d_model, H*d_v)
    wfc_h = wfc.reshape(n_heads, d_v, d_model).astype(jnp.bfloat16)
    mask_bf = mask.astype(jnp.bfloat16)                          # 4x less HBM than f32

    vmem_limit, tq_target = _vmem_and_tile()

    # ---- Kernel A: packed K/V projections, grid=(B,) --------------------------
    kp, vp = pl.pallas_call(
        _kv_proj_kernel,
        out_shape=(
            jax.ShapeDtypeStruct((B, Sk, n_heads * d_k), jnp.bfloat16),
            jax.ShapeDtypeStruct((B, Sk, n_heads * d_v), jnp.bfloat16),
        ),
        grid_spec=pltpu.PrefetchScalarGridSpec(
            num_scalar_prefetch=0,
            grid=(B,),
            in_specs=[
                pl.BlockSpec((1, Sk, d_model), lambda b: (b, 0, 0)),            # K_in
                pl.BlockSpec((1, Sk, d_model), lambda b: (b, 0, 0)),            # V_in
                pl.BlockSpec((d_model, n_heads * d_k), lambda b: (0, 0)),       # W_K packed
                pl.BlockSpec((d_model, n_heads * d_v), lambda b: (0, 0)),       # W_V packed
            ],
            out_specs=[
                pl.BlockSpec((1, Sk, n_heads * d_k), lambda b: (b, 0, 0)),
                pl.BlockSpec((1, Sk, n_heads * d_v), lambda b: (b, 0, 0)),
            ],
        ),
        compiler_params=pltpu.CompilerParams(
            dimension_semantics=("parallel",),
            vmem_limit_bytes=vmem_limit,
        ),
    )(k, v, wk_p, wv_p)

    # ---- Kernel B: fused Q proj + attention + fc + residual + LayerNorm -------
    TQ = _pick_q_tile(S, tq_target)
    nq = S // TQ

    kern = functools.partial(
        _attn_kernel, n_heads=n_heads, d_k=d_k, d_v=d_v, eps=eps,
        return_attn=return_attn, attn_dtype=attn_dtype)

    out_struct = jax.ShapeDtypeStruct((B, S, d_model), jnp.float32)
    out_spec = pl.BlockSpec((1, TQ, d_model), lambda b, qi: (b, qi, 0))
    if return_attn:
        out_shape = (out_struct,
                     jax.ShapeDtypeStruct((B, n_heads, S, Sk), attn_dtype))
        out_specs = (out_spec,
                     pl.BlockSpec((1, n_heads, TQ, Sk), lambda b, qi: (b, 0, qi, 0)))
    else:
        out_shape = out_struct
        out_specs = out_spec

    results = pl.pallas_call(
        kern,
        out_shape=out_shape,
        grid_spec=pltpu.PrefetchScalarGridSpec(
            num_scalar_prefetch=0,
            grid=(B, nq),
            in_specs=[
                pl.BlockSpec((1, TQ, d_model), lambda b, qi: (b, qi, 0)),        # Q / residual
                pl.BlockSpec((1, Sk, n_heads * d_k), lambda b, qi: (b, 0, 0)),   # Kp packed
                pl.BlockSpec((1, Sk, n_heads * d_v), lambda b, qi: (b, 0, 0)),   # Vp packed
                pl.BlockSpec((1, TQ, Sk), lambda b, qi: (b, qi, 0)),             # mask (bf16)
                pl.BlockSpec((d_model, n_heads * d_k), lambda b, qi: (0, 0)),    # W_Q packed*scale
                pl.BlockSpec((n_heads, d_v, d_model), lambda b, qi: (0, 0, 0)),  # W_fc head-major
                pl.BlockSpec((1, d_model), lambda b, qi: (0, 0)),                # gamma
                pl.BlockSpec((1, d_model), lambda b, qi: (0, 0)),                # beta
            ],
            out_specs=out_specs,
        ),
        compiler_params=pltpu.CompilerParams(
            dimension_semantics=("parallel", "parallel"),
            vmem_limit_bytes=vmem_limit,
        ),
    )(q, kp, vp, mask_bf, wq_p, wfc_h, gamma, beta)

    if return_attn:
        return results[0], results[1]
    return results


# ---------------------------------------------------------------------------
# Pure-JAX reference matching the PyTorch module semantics (f32).
# ---------------------------------------------------------------------------
def reference_mha(q, k, v, mask, params, *, n_heads, d_k, d_v, eps=1e-5):
    wq, wk, wv, wfc, gamma, beta = params
    B, S, d_model = q.shape

    def split_heads(x, dh):
        return x.reshape(B, -1, n_heads, dh).transpose(0, 2, 1, 3)  # (B,H,S,dh)

    Q = split_heads(q @ wq, d_k)
    K = split_heads(k @ wk, d_k)
    V = split_heads(v @ wv, d_v)

    scores = jnp.einsum("bhqd,bhkd->bhqk", Q, K) / math.sqrt(d_k)
    scores = jnp.where(mask[:, None, :, :] > 0.5, -1e9, scores)
    attn = jax.nn.softmax(scores, axis=-1)
    ctx = jnp.einsum("bhqk,bhkd->bhqd", attn, V)
    ctx = ctx.transpose(0, 2, 1, 3).reshape(B, S, n_heads * d_v)
    out = ctx @ wfc + q
    mean = jnp.mean(out, axis=-1, keepdims=True)
    var = jnp.mean((out - mean) ** 2, axis=-1, keepdims=True)
    out = (out - mean) * jax.lax.rsqrt(var + eps) * gamma[0] + beta[0]
    return out, attn


if __name__ == "__main__":
    # Small shapes consistent with the module.
    B, S, d_model = 2, 8, 32
    n_heads, d_k, d_v = 4, 8, 8

    key = jax.random.PRNGKey(0)
    kq, kk, kv, km, k1, k2, k3, k4 = jax.random.split(key, 8)

    Q_in = jax.random.normal(kq, (B, S, d_model), jnp.float32)
    K_in = jax.random.normal(kk, (B, S, d_model), jnp.float32)
    V_in = jax.random.normal(kv, (B, S, d_model), jnp.float32)
    # boolean attention mask (True == masked), passed as float32
    mask = (jax.random.uniform(km, (B, S, S)) < 0.3).astype(jnp.float32)

    # Deterministic parameter init (synthetic weights, (in, out) layout).
    s = 1.0 / math.sqrt(d_model)
    W_Q = jax.random.normal(k1, (d_model, n_heads * d_k), jnp.float32) * s
    W_K = jax.random.normal(k2, (d_model, n_heads * d_k), jnp.float32) * s
    W_V = jax.random.normal(k3, (d_model, n_heads * d_v), jnp.float32) * s
    W_fc = jax.random.normal(k4, (n_heads * d_v, d_model), jnp.float32) * s
    gamma = jnp.ones((1, d_model), jnp.float32)   # LayerNorm default weight
    beta = jnp.zeros((1, d_model), jnp.float32)   # LayerNorm default bias
    params = (W_Q, W_K, W_V, W_fc, gamma, beta)

    # Full path (returns attention probabilities, like the PyTorch module).
    out, attn = multi_head_attention(
        Q_in, K_in, V_in, mask, params, n_heads=n_heads, d_k=d_k, d_v=d_v,
        return_attn=True)
    out = jax.block_until_ready(out)
    attn = jax.block_until_ready(attn)

    out_ref, attn_ref = reference_mha(
        Q_in, K_in, V_in, mask, params, n_heads=n_heads, d_k=d_k, d_v=d_v)

    # bf16 MXU operands + bf16 attn storage -> relaxed tolerances vs f32 ref.
    np.testing.assert_allclose(np.asarray(out), np.asarray(out_ref),
                               atol=5e-2, rtol=5e-2)
    np.testing.assert_allclose(np.asarray(attn.astype(jnp.float32)),
                               np.asarray(attn_ref), atol=4e-2, rtol=4e-2)

    # Fast path: skip the O(H*S*Sk) attention-probability writeback entirely.
    out_only = multi_head_attention(
        Q_in, K_in, V_in, mask, params, n_heads=n_heads, d_k=d_k, d_v=d_v,
        return_attn=False)
    out_only = jax.block_until_ready(out_only)
    np.testing.assert_allclose(np.asarray(out_only), np.asarray(out_ref),
                               atol=5e-2, rtol=5e-2)

    print("KERNEL_OK")
</pallas_src>

<mosaic_0001>
module attributes {stable_mosaic.version = 11 : i64} {
  func.func @_kv_proj_kernel(%arg0: i32, %arg1: memref<1x8x32xf32, #tpu.memory_space<vmem>>, %arg2: memref<1x8x32xf32, #tpu.memory_space<vmem>>, %arg3: memref<32x32xbf16, #tpu.memory_space<vmem>>, %arg4: memref<32x32xbf16, #tpu.memory_space<vmem>>, %arg5: memref<1x8x32xbf16, #tpu.memory_space<vmem>>, %arg6: memref<1x8x32xbf16, #tpu.memory_space<vmem>>) attributes {dimension_semantics = [#tpu.dimension_semantics<parallel>], iteration_bounds = array<i64: 2>, scalar_prefetch = 0 : i64, scratch_operands = 0 : i64, tpu.core_type = #tpu.core_type<tc>, window_params = [{transform_indices = @transform_0, window_bounds = array<i64: 1, 8, 32>}, {transform_indices = @transform_1, window_bounds = array<i64: 1, 8, 32>}, {pipeline_mode = #tpu.pipeline_mode<synchronous>, transform_indices = @transform_2, window_bounds = array<i64: 32, 32>}, {pipeline_mode = #tpu.pipeline_mode<synchronous>, transform_indices = @transform_3, window_bounds = array<i64: 32, 32>}, {transform_indices = @transform_4, window_bounds = array<i64: 1, 8, 32>}, {transform_indices = @transform_5, window_bounds = array<i64: 1, 8, 32>}]} {
    %c0 = arith.constant 0 : index
    %c0_0 = arith.constant 0 : index
    %c0_1 = arith.constant 0 : index
    %0 = vector.load %arg1[%c0, %c0_0, %c0_1] : memref<1x8x32xf32, #tpu.memory_space<vmem>>, vector<1x8x32xf32>
    %1 = vector.shape_cast %0 : vector<1x8x32xf32> to vector<8x32xf32>
    %2 = arith.truncf %1 : vector<8x32xf32> to vector<8x32xbf16>
    %c0_2 = arith.constant 0 : index
    %c0_3 = arith.constant 0 : index
    %c0_4 = arith.constant 0 : index
    %3 = vector.load %arg2[%c0_2, %c0_3, %c0_4] : memref<1x8x32xf32, #tpu.memory_space<vmem>>, vector<1x8x32xf32>
    %4 = vector.shape_cast %3 : vector<1x8x32xf32> to vector<8x32xf32>
    %5 = arith.truncf %4 : vector<8x32xf32> to vector<8x32xbf16>
    %c0_5 = arith.constant 0 : index
    %c0_6 = arith.constant 0 : index
    %6 = vector.load %arg3[%c0_5, %c0_6] : memref<32x32xbf16, #tpu.memory_space<vmem>>, vector<32x32xbf16>
    %cst = arith.constant dense<0.000000e+00> : vector<8x32xf32>
    %7 = tpu.matmul %2, %6, %cst {dimension_numbers = #tpu.dot_dimension_numbers<[1], [0], [0], [1], [0, 0, 1, 1], [], []>} : vector<8x32xbf16>, vector<32x32xbf16>, vector<8x32xf32> -> vector<8x32xf32>
    %c0_7 = arith.constant 0 : index
    %c0_8 = arith.constant 0 : index
    %8 = vector.load %arg4[%c0_7, %c0_8] : memref<32x32xbf16, #tpu.memory_space<vmem>>, vector<32x32xbf16>
    %cst_9 = arith.constant dense<0.000000e+00> : vector<8x32xf32>
    %9 = tpu.matmul %5, %8, %cst_9 {dimension_numbers = #tpu.dot_dimension_numbers<[1], [0], [0], [1], [0, 0, 1, 1], [], []>} : vector<8x32xbf16>, vector<32x32xbf16>, vector<8x32xf32> -> vector<8x32xf32>
    %10 = arith.truncf %7 : vector<8x32xf32> to vector<8x32xbf16>
    %c0_10 = arith.constant 0 : index
    %c0_11 = arith.constant 0 : index
    %c0_12 = arith.constant 0 : index
    %11 = vector.load %arg5[%c0_10, %c0_11, %c0_12] : memref<1x8x32xbf16, #tpu.memory_space<vmem>>, vector<1x8x32xbf16>
    %12 = vector.shape_cast %11 : vector<1x8x32xbf16> to vector<8x32xbf16>
    %13 = vector.shape_cast %10 : vector<8x32xbf16> to vector<1x8x32xbf16>
    tpu.vector_store %arg5[%c0_10, %c0_11, %c0_12], %13 {strides = array<i32>} : memref<1x8x32xbf16, #tpu.memory_space<vmem>>, vector<1x8x32xbf16>,
    %14 = arith.truncf %9 : vector<8x32xf32> to vector<8x32xbf16>
    %c0_13 = arith.constant 0 : index
    %c0_14 = arith.constant 0 : index
    %c0_15 = arith.constant 0 : index
    %15 = vector.load %arg6[%c0_13, %c0_14, %c0_15] : memref<1x8x32xbf16, #tpu.memory_space<vmem>>, vector<1x8x32xbf16>
    %16 = vector.shape_cast %15 : vector<1x8x32xbf16> to vector<8x32xbf16>
    %17 = vector.shape_cast %14 : vector<8x32xbf16> to vector<1x8x32xbf16>
    tpu.vector_store %arg6[%c0_13, %c0_14, %c0_15], %17 {strides = array<i32>} : memref<1x8x32xbf16, #tpu.memory_space<vmem>>, vector<1x8x32xbf16>,
    return
  }
  func.func @transform_0(%arg0: i32) -> (i32, i32, i32) {
    %c0_i32 = arith.constant 0 : i32
    %c0_i32_0 = arith.constant 0 : i32
    %c0_i32_1 = arith.constant 0 : i32
    return %arg0, %c0_i32, %c0_i32_0 : i32, i32, i32
  }
  func.func @transform_1(%arg0: i32) -> (i32, i32, i32) {
    %c0_i32 = arith.constant 0 : i32
    %c0_i32_0 = arith.constant 0 : i32
    %c0_i32_1 = arith.constant 0 : i32
    return %arg0, %c0_i32, %c0_i32_0 : i32, i32, i32
  }
  func.func @transform_2(%arg0: i32) -> (i32, i32) {
    %c0_i32 = arith.constant 0 : i32
    %c0_i32_0 = arith.constant 0 : i32
    %c0_i32_1 = arith.constant 0 : i32
    return %c0_i32, %c0_i32_0 : i32, i32
  }
  func.func @transform_3(%arg0: i32) -> (i32, i32) {
    %c0_i32 = arith.constant 0 : i32
    %c0_i32_0 = arith.constant 0 : i32
    %c0_i32_1 = arith.constant 0 : i32
    return %c0_i32, %c0_i32_0 : i32, i32
  }
  func.func @transform_4(%arg0: i32) -> (i32, i32, i32) {
    %c0_i32 = arith.constant 0 : i32
    %c0_i32_0 = arith.constant 0 : i32
    %c0_i32_1 = arith.constant 0 : i32
    return %arg0, %c0_i32, %c0_i32_0 : i32, i32, i32
  }
  func.func @transform_5(%arg0: i32) -> (i32, i32, i32) {
    %c0_i32 = arith.constant 0 : i32
    %c0_i32_0 = arith.constant 0 : i32
    %c0_i32_1 = arith.constant 0 : i32
    return %arg0, %c0_i32, %c0_i32_0 : i32, i32, i32
  }
}

</mosaic_0001>

<llo_original>
// kernel: tpu_custom_call.1
$region0: #{tpu_custom_call.1}
  #allocation0 [shape = 'u32[]', space=smem, size = 0x4, offset = 0x4, fixed_abs, tag = 'smem constant byte address 0x4 - core index']
  #allocation1 [shape = 'u32[144,128]{1,0:T(1,128)}', space=vmem, size = 0x12000, scoped, tag = 'internal scratch']
  %s0 = inlined_call_operand.hbm [shape: f32[2,8,32], index: 0, kind: input, shape index: {}]
  %s1 = inlined_call_operand.hbm [shape: f32[2,8,32], index: 1, kind: input, shape index: {}]
  %s2 = inlined_call_operand.hbm [shape: bf16[32,32], index: 2, kind: input, shape index: {}]
  %s3 = inlined_call_operand.hbm [shape: bf16[32,32], index: 3, kind: input, shape index: {}]
  %s4 = inlined_call_operand.hbm [shape: bf16[2,8,32], index: 4, kind: output, shape index: {0}]
  %s5 = inlined_call_operand.hbm [shape: bf16[2,8,32], index: 5, kind: output, shape index: {1}]
  %6 = xla_tuple %s4, %s5
  %s7 = sld [smem:[#allocation0]]
  $region73: #{tpu_custom_call.1} parent=0
    _
  %s9 = ssub.s32 1, %s7
  %s10 = scalar_select 0, %s9, %s7
  $region1: #{tpu_custom_call.1} parent=0
    #allocation2 [shape = 'u8[8192]{0}', space=vmem, size = 0x2000, scoped, tag = 'input window, operand 0']
    #allocation3 [shape = 's32[2]{0}', space=sflag, size = 0x8, scoped, tag = 'scoped memory for tpu_custom_call.1']
    #allocation4 [shape = 's32[2]{0}', space=sflag, size = 0x8, scoped, tag = 'scoped memory for tpu_custom_call.1']
    #allocation5 [shape = 'u8[8192]{0}', space=vmem, size = 0x2000, scoped, tag = 'input window, operand 1']
    #allocation6 [shape = 's32[2]{0}', space=sflag, size = 0x8, scoped, tag = 'scoped memory for tpu_custom_call.1']
    #allocation7 [shape = 'u8[8192]{0}', space=vmem, size = 0x2000, scoped, tag = 'input window, operand 2, single buffered']
    #allocation8 [shape = 'u8[8192]{0}', space=vmem, size = 0x2000, scoped, tag = 'input window, operand 3, single buffered']
    #allocation9 [shape = 's32[1]{0}', space=sflag, size = 0x4, scoped, tag = 'scoped memory for tpu_custom_call.1']
    #allocation10 [shape = 'u8[4096]{0}', space=vmem, size = 0x1000, scoped, tag = 'output window, operand 0']
    #allocation11 [shape = 'u8[4096]{0}', space=vmem, size = 0x1000, scoped, tag = 'output window, operand 1']
    #allocation12 [shape = 's32[2]{0}', space=sflag, size = 0x8, scoped, tag = 'scoped memory for tpu_custom_call.1']
    %11 = vsyncpa [#allocation3], 0
    %s12 = scalar_lea.sflag [#allocation3], 1
    %13 = vsyncpa %s12, 0
    %14 = vsyncpa [#allocation6], 0
    %s15 = scalar_lea.sflag [#allocation6], 1
    %16 = vsyncpa %s15, 0
    %17 = vsyncpa [#allocation9], 0
    %18 = vsyncpa [#allocation4], 0
    %s19 = scalar_lea.sflag [#allocation4], 1
    %20 = vsyncpa %s19, 0
    %21 = vsyncpa [#allocation12], 0
    %s22 = scalar_lea.sflag [#allocation12], 1
    %23 = vsyncpa %s22, 0
    loop: start=0, step=1, limit=4
    $region2: #{tpu_custom_call.1} parent=1 // loop_pre_header
      _
    $region3: #{tpu_custom_call.1} parent=1 // loop_header
      %s25 = sphi 0, %s29
      %p26 = scmp.ge.s32.totalorder %s25, 4
      %s35 = sphi 0, %s37
      %s38 = sphi 0, %s35
      %s39 = sphi 0, %s38
      %s55 = sphi 0, %s39
      %s61 = sphi 0, %s63
      %s64 = sphi 0, %s61
      %s65 = sphi 0, %s64
      %s81 = sphi 0, %s65
      %s85 = sphi 0, %s85
      %s87 = sphi 0, %s85
      %s88 = sphi 0, %s87
      %s102 = sphi 0, %s88
      %s106 = sphi 0, %s106
      %s108 = sphi 0, %s106
      %s109 = sphi 0, %s108
      %s123 = sphi 0, %s109
      %s129 = sphi 0, %s131
      %s132 = sphi 0, %s129
      %s133 = sphi 0, %s132
      %s149 = sphi 0, %s133
      %s155 = sphi 0, %s157
      %s158 = sphi 0, %s155
      %s159 = sphi 0, %s158
      %s175 = sphi 0, %s159
    $region4: #{tpu_custom_call.1} parent=1 // loop_header_branch
      %28 = sbr.rel (%p26) target = $region8
    $region5: #{tpu_custom_call.1} parent=1 // loop_body
      %s30 = ssub.s32 %s25, 1
      %s31 = ssub.s32 %s25, 2
      %s32 = sadd.s32 %s25, 1
      %s33 = ssub.s32 %s25, %s32
      %p34 = scmp.eq.s32.totalorder %s33, 0
      %s36 = sadd.s32 %s35, 1
      %s37 = scalar_select %p34, %s35, %s36
      %p40 = pneg %p34
      %p41 = scmp.eq.s32.totalorder %s25, 1
      %p42 = por %p40, %p41
      %p43 = scmp.ne.s32.totalorder %s35, %s38
      %p44 = scmp.eq.s32.totalorder %s25, 0
      %p45 = por %p43, %p44
      %p46 = scmp.ne.s32.totalorder %s35, %s38
      %p47 = scmp.eq.s32.totalorder %s30, 1
      %p48 = por %p46, %p47
      %p49 = scmp.ne.s32.totalorder %s38, %s39
      %p50 = scmp.eq.s32.totalorder %s30, 0
      %p51 = por %p49, %p50
      %p52 = scmp.ne.s32.totalorder %s38, %s39
      %p53 = scmp.eq.s32.totalorder %s31, 1
      %p54 = por %p52, %p53
      %p56 = scmp.ne.s32.totalorder %s39, %s55
      %p57 = scmp.eq.s32.totalorder %s31, 0
      %p58 = por %p56, %p57
      %s59 = ssub.s32 %s25, %s32
      %p60 = scmp.eq.s32.totalorder %s59, 0
      %s62 = sadd.s32 %s61, 1
      %s63 = scalar_select %p60, %s61, %s62
      %p66 = pneg %p60
      %p67 = scmp.eq.s32.totalorder %s25, 1
      %p68 = por %p66, %p67
      %p69 = scmp.ne.s32.totalorder %s61, %s64
      %p70 = scmp.eq.s32.totalorder %s25, 0
      %p71 = por %p69, %p70
      %p72 = scmp.ne.s32.totalorder %s61, %s64
      %p73 = scmp.eq.s32.totalorder %s30, 1
      %p74 = por %p72, %p73
      %p75 = scmp.ne.s32.totalorder %s64, %s65
      %p76 = scmp.eq.s32.totalorder %s30, 0
      %p77 = por %p75, %p76
      %p78 = scmp.ne.s32.totalorder %s64, %s65
      %p79 = scmp.eq.s32.totalorder %s31, 1
      %p80 = por %p78, %p79
      %p82 = scmp.ne.s32.totalorder %s65, %s81
      %p83 = scmp.eq.s32.totalorder %s31, 0
      %p84 = por %p82, %p83
      %s86 = sadd.s32 %s85, 1
      %p89 = scmp.eq.s32.totalorder %s25, 1
      %p90 = scmp.ne.s32.totalorder %s85, %s87
      %p91 = scmp.eq.s32.totalorder %s25, 0
      %p92 = por %p90, %p91
      %p93 = scmp.ne.s32.totalorder %s85, %s87
      %p94 = scmp.eq.s32.totalorder %s30, 1
      %p95 = por %p93, %p94
      %p96 = scmp.ne.s32.totalorder %s87, %s88
      %p97 = scmp.eq.s32.totalorder %s30, 0
      %p98 = por %p96, %p97
      %p99 = scmp.ne.s32.totalorder %s87, %s88
      %p100 = scmp.eq.s32.totalorder %s31, 1
      %p101 = por %p99, %p100
      %p103 = scmp.ne.s32.totalorder %s88, %s102
      %p104 = scmp.eq.s32.totalorder %s31, 0
      %p105 = por %p103, %p104
      %s107 = sadd.s32 %s106, 1
      %p110 = scmp.eq.s32.totalorder %s25, 1
      %p111 = scmp.ne.s32.totalorder %s106, %s108
      %p112 = scmp.eq.s32.totalorder %s25, 0
      %p113 = por %p111, %p112
      %p114 = scmp.ne.s32.totalorder %s106, %s108
      %p115 = scmp.eq.s32.totalorder %s30, 1
      %p116 = por %p114, %p115
      %p117 = scmp.ne.s32.totalorder %s108, %s109
      %p118 = scmp.eq.s32.totalorder %s30, 0
      %p119 = por %p117, %p118
      %p120 = scmp.ne.s32.totalorder %s108, %s109
      %p121 = scmp.eq.s32.totalorder %s31, 1
      %p122 = por %p120, %p121
      %p124 = scmp.ne.s32.totalorder %s109, %s123
      %p125 = scmp.eq.s32.totalorder %s31, 0
      %p126 = por %p124, %p125
      %s127 = ssub.s32 %s25, %s32
      %p128 = scmp.eq.s32.totalorder %s127, 0
      %s130 = sadd.s32 %s129, 1
      %s131 = scalar_select %p128, %s129, %s130
      %p134 = pneg %p128
      %p135 = scmp.eq.s32.totalorder %s25, 1
      %p136 = por %p134, %p135
      %p137 = scmp.ne.s32.totalorder %s129, %s132
      %p138 = scmp.eq.s32.totalorder %s25, 0
      %p139 = por %p137, %p138
      %p140 = scmp.ne.s32.totalorder %s129, %s132
      %p141 = scmp.eq.s32.totalorder %s30, 1
      %p142 = por %p140, %p141
      %p143 = scmp.ne.s32.totalorder %s132, %s133
      %p144 = scmp.eq.s32.totalorder %s30, 0
      %p145 = por %p143, %p144
      %p146 = scmp.ne.s32.totalorder %s132, %s133
      %p147 = scmp.eq.s32.totalorder %s31, 1
      %p148 = por %p146, %p147
      %p150 = scmp.ne.s32.totalorder %s133, %s149
      %p151 = scmp.eq.s32.totalorder %s31, 0
      %p152 = por %p150, %p151
      %s153 = ssub.s32 %s25, %s32
      %p154 = scmp.eq.s32.totalorder %s153, 0
      %s156 = sadd.s32 %s155, 1
      %s157 = scalar_select %p154, %s155, %s156
      %p160 = pneg %p154
      %p161 = scmp.eq.s32.totalorder %s25, 1
      %p162 = por %p160, %p161
      %p163 = scmp.ne.s32.totalorder %s155, %s158
      %p164 = scmp.eq.s32.totalorder %s25, 0
      %p165 = por %p163, %p164
      %p166 = scmp.ne.s32.totalorder %s155, %s158
      %p167 = scmp.eq.s32.totalorder %s30, 1
      %p168 = por %p166, %p167
      %p169 = scmp.ne.s32.totalorder %s158, %s159
      %p170 = scmp.eq.s32.totalorder %s30, 0
      %p171 = por %p169, %p170
      %p172 = scmp.ne.s32.totalorder %s158, %s159
      %p173 = scmp.eq.s32.totalorder %s31, 1
      %p174 = por %p172, %p173
      %p176 = scmp.ne.s32.totalorder %s159, %s175
      %p177 = scmp.eq.s32.totalorder %s31, 0
      %p178 = por %p176, %p177
      %p179 = scmp.le.s32.totalorder 1, %s25
      %p180 = scmp.lt.s32.totalorder %s25, 3
      %p181 = pnand %p179, %p180
      %p182 = pneg %p181
      // Predicated region
      $region9: #{tpu_custom_call.1} parent=5 // pred_check
        _
      $region10: #{tpu_custom_call.1} parent=5 // pred_check_branch
        %184 = sbr.rel (%p181) target = $region12
      $region11: #{tpu_custom_call.1} parent=5 // pred_region
        %s185 = ssub.s32 %s25, 1
        // Predicated region
        $region13: #{tpu_custom_call.1} parent=11 // pred_check
          %p186 = pneg %p98
        $region14: #{tpu_custom_call.1} parent=11 // pred_check_branch
          %188 = sbr.rel (%p186) target = $region16
        $region15: #{tpu_custom_call.1} parent=11 // pred_region
          %s190 = ssub.s32 256, 256
          %191 = vsyncadd [#allocation6], %s190
          %s192 = sshll.u32 [#allocation7], 4
          %s193 = int_to_ptr.vmem [resolvable:$true] %s192
          %198 = dma.hbm_to_vmem [thread:$0]  %s2, 256, %s193, [#allocation6], 64, 64, 4
        $region16: #{tpu_custom_call.1} parent=11 // pred_fallthru
          _
        // Predicated region
        $region17: #{tpu_custom_call.1} parent=11 // pred_check
          %p199 = pneg %p119
        $region18: #{tpu_custom_call.1} parent=11 // pred_check_branch
          %201 = sbr.rel (%p199) target = $region20
        $region19: #{tpu_custom_call.1} parent=11 // pred_region
          %s203 = ssub.s32 256, 256
          %204 = vsyncadd [#allocation9], %s203
          %s205 = sshll.u32 [#allocation8], 4
          %s206 = int_to_ptr.vmem [resolvable:$true] %s205
          %211 = dma.hbm_to_vmem [thread:$0]  %s3, 256, %s206, [#allocation9], 64, 64, 4
        $region20: #{tpu_custom_call.1} parent=11 // pred_fallthru
          _
      $region12: #{tpu_custom_call.1} parent=5 // pred_fallthru
        _
      %p212 = scmp.lt.s32.totalorder %s25, 2
      // Predicated region
      $region21: #{tpu_custom_call.1} parent=5 // pred_check
        %p213 = pneg %p212
      $region22: #{tpu_custom_call.1} parent=5 // pred_check_branch
        %215 = sbr.rel (%p213) target = $region24
      $region23: #{tpu_custom_call.1} parent=5 // pred_region
        // Predicated region
        $region25: #{tpu_custom_call.1} parent=23 // pred_check
          %p216 = pneg %p45
        $region26: #{tpu_custom_call.1} parent=23 // pred_check_branch
          %218 = sbr.rel (%p216) target = $region28
        $region27: #{tpu_custom_call.1} parent=23 // pred_region
          %s219 = sand.u32 %s35, 1
          %s220 = scalar_lea.sflag [#allocation3], %s219
          %s221 = sand.u32 %s35, 1
          %s222 = smul.addr %s221, 8
          %s223 = scalar_lea.vmem [#allocation2], %s222
          %s225 = ssub.s32 128, 128
          %226 = vsyncadd %s220, %s225
          %s227 = smul.addr %s25, 128
          %s228 = scalar_lea.hbm %s0, %s227
          %s230 = sshll.u32 %s223, 4
          %s231 = int_to_ptr.vmem [resolvable:$true] %s230
          %233 = dma.hbm_to_vmem [thread:$0]  %s228, 128, %s231, %s220
        $region28: #{tpu_custom_call.1} parent=23 // pred_fallthru
          _
        // Predicated region
        $region29: #{tpu_custom_call.1} parent=23 // pred_check
          %p234 = pneg %p71
        $region30: #{tpu_custom_call.1} parent=23 // pred_check_branch
          %236 = sbr.rel (%p234) target = $region32
        $region31: #{tpu_custom_call.1} parent=23 // pred_region
          %s237 = sand.u32 %s25, 1
          %s238 = scalar_lea.sflag [#allocation6], %s237
          %s239 = sand.u32 %s61, 1
          %s240 = smul.addr %s239, 8
          %s241 = scalar_lea.vmem [#allocation5], %s240
          %s243 = ssub.s32 128, 128
          %244 = vsyncadd %s238, %s243
          %s245 = smul.addr %s25, 128
          %s246 = scalar_lea.hbm %s1, %s245
          %s248 = sshll.u32 %s241, 4
          %s249 = int_to_ptr.vmem [resolvable:$true] %s248
          %251 = dma.hbm_to_vmem [thread:$0]  %s246, 128, %s249, %s238
        $region32: #{tpu_custom_call.1} parent=23 // pred_fallthru
          _
      $region24: #{tpu_custom_call.1} parent=5 // pred_fallthru
        _
      %p252 = scmp.le.s32.totalorder 1, %s25
      %p253 = scmp.lt.s32.totalorder %s25, 3
      %p254 = pnand %p252, %p253
      %p255 = pneg %p254
      // Predicated region
      $region33: #{tpu_custom_call.1} parent=5 // pred_check
        _
      $region34: #{tpu_custom_call.1} parent=5 // pred_check_branch
        %257 = sbr.rel (%p254) target = $region36
      $region35: #{tpu_custom_call.1} parent=5 // pred_region
        %s258 = ssub.s32 %s25, 1
        %s259 = sand.u32 %s38, 1
        %s260 = scalar_lea.sflag [#allocation3], %s259
        %s261 = sand.u32 %s38, 1
        %s262 = smul.addr %s261, 8
        %s263 = scalar_lea.vmem [#allocation2], %s262
        // Predicated region
        $region37: #{tpu_custom_call.1} parent=35 // pred_check
          %p264 = pneg %p51
        $region38: #{tpu_custom_call.1} parent=35 // pred_check_branch
          %266 = sbr.rel (%p264) target = $region40
        $region39: #{tpu_custom_call.1} parent=35 // pred_region
          %267 = dma.done %s260, 128
        $region40: #{tpu_custom_call.1} parent=35 // pred_fallthru
          _
        %s268 = sand.u32 %s30, 1
        %s269 = scalar_lea.sflag [#allocation6], %s268
        %s270 = sand.u32 %s64, 1
        %s271 = smul.addr %s270, 8
        %s272 = scalar_lea.vmem [#allocation5], %s271
        // Predicated region
        $region41: #{tpu_custom_call.1} parent=35 // pred_check
          %p273 = pneg %p77
        $region42: #{tpu_custom_call.1} parent=35 // pred_check_branch
          %275 = sbr.rel (%p273) target = $region44
        $region43: #{tpu_custom_call.1} parent=35 // pred_region
          %276 = dma.done %s269, 128
        $region44: #{tpu_custom_call.1} parent=35 // pred_fallthru
          _
        // Predicated region
        $region45: #{tpu_custom_call.1} parent=35 // pred_check
          %p277 = pneg %p98
        $region46: #{tpu_custom_call.1} parent=35 // pred_check_branch
          %279 = sbr.rel (%p277) target = $region48
        $region47: #{tpu_custom_call.1} parent=35 // pred_region
          %280 = dma.done [#allocation6], 256
        $region48: #{tpu_custom_call.1} parent=35 // pred_fallthru
          _
        // Predicated region
        $region49: #{tpu_custom_call.1} parent=35 // pred_check
          %p281 = pneg %p119
        $region50: #{tpu_custom_call.1} parent=35 // pred_check_branch
          %283 = sbr.rel (%p281) target = $region52
        $region51: #{tpu_custom_call.1} parent=35 // pred_region
          %284 = dma.done [#allocation9], 256
        $region52: #{tpu_custom_call.1} parent=35 // pred_fallthru
          _
        %s285 = sand.u32 %s38, 1
        %s286 = scalar_lea.sflag [#allocation3], %s285
        %s287 = sand.u32 %s38, 1
        %s288 = smul.addr %s287, 8
        %s289 = scalar_lea.vmem [#allocation2], %s288
        %p290 = pneg %p51
        %p291 = pneg %p48
        %s292 = sand.u32 %s30, 1
        %s293 = scalar_lea.sflag [#allocation6], %s292
        %s294 = sand.u32 %s64, 1
        %s295 = smul.addr %s294, 8
        %s296 = scalar_lea.vmem [#allocation5], %s295
        %p297 = pneg %p77
        %p298 = pneg %p74
        %p299 = pneg %p98
        %p300 = pneg %p95
        %p301 = pneg %p119
        %p302 = pneg %p116
        %p303 = pneg %p145
        %p304 = pneg %p142
        %s305 = sand.u32 %s132, 1
        %s306 = scalar_lea.sflag [#allocation4], %s305
        %s307 = sand.u32 %s132, 1
        %s308 = smul.addr %s307, 4
        %s309 = scalar_lea.vmem [#allocation10], %s308
        %p310 = pneg %p171
        %p311 = pneg %p168
        %s312 = sand.u32 %s158, 1
        %s313 = scalar_lea.sflag [#allocation12], %s312
        %s314 = sand.u32 %s158, 1
        %s315 = smul.addr %s314, 4
        %s316 = scalar_lea.vmem [#allocation11], %s315
        %v318 = vld [vmem:[%s263] sm:$0xff]
        %v319 = vpack.c.bf16 %v318, %v318
        %v320 = vld [vmem:[%s272] sm:$0xff]
        %v321 = vpack.c.bf16 %v320, %v320
        %v322 = vld [vmem:[#allocation7] sm:$0xf]
        %v323 = vld [vmem:[#allocation7 + $0x4] sm:$0xf]
        %v324 = vld [vmem:[#allocation7 + $0x8] sm:$0xf]
        %v325 = vld [vmem:[#allocation7 + $0xc] sm:$0xf]
        %v330 = vunpack.c.l.b16 %v322
        %v331 = vunpack.c.l.b16 %v323
        %v332 = vunpack.c.l.b16 %v324
        %v333 = vunpack.c.l.b16 %v325
        %v334 = vpack.c.b16 %v331, %v330
        %v335 = vpack.c.b16 %v333, %v332
        %vm338 = vcmask 261120
        %v340 = vsel %vm338, %v319, 0
        %342 = vmatprep.subr.bf16.mxu0 0
        %343 = vmatpush1.bf16.msra.mxu0 0
        %344 = vmatprep.subr.bf16.mxu0 0
        %345 = vmatpush1.bf16.msra.mxu0 0
        %346 = vmatprep.subr.bf16.mxu0 0
        %347 = vmatpush1.bf16.msra.mxu0 0
        %348 = vmatprep.subr.bf16.mxu0 0
        %349 = vmatpush1.bf16.msra.mxu0 0
        %350 = vmatprep.subr.bf16.mxu0 0
        %351 = vmatpush1.bf16.msra.mxu0 0
        %352 = vmatprep.subr.bf16.mxu0 0
        %353 = vmatpush1.bf16.msra.mxu0 0
        %354 = vmatprep.subr.bf16.mxu0 0
        %355 = vmatpush1.bf16.msra.mxu0 %v335
        %356 = vmatprep.subr.bf16.mxu0 0
        %357 = vmatpush1.bf16.msra.mxu0 %v334
        %358 = vmatprep.subr.bf16.mxu0 0
        %359 = vmatpush2.bf16.msra.mxu0 0
        %360 = vmatprep.subr.bf16.mxu0 0
        %361 = vmatpush2.bf16.msra.mxu0 0
        %362 = vmatprep.subr.bf16.mxu0 0
        %363 = vmatpush2.bf16.msra.mxu0 0
        %364 = vmatprep.subr.bf16.mxu0 0
        %365 = vmatpush2.bf16.msra.mxu0 0
        %366 = vmatprep.subr.bf16.mxu0 0
        %367 = vmatpush2.bf16.msra.mxu0 0
        %368 = vmatprep.subr.bf16.mxu0 0
        %369 = vmatpush2.bf16.msra.mxu0 0
        %370 = vmatprep.subr.bf16.mxu0 0
        %371 = vmatpush2.bf16.msra.mxu0 0
        %372 = vmatprep.subr.bf16.mxu0 0
        %373 = vmatpush2.bf16.msra.mxu0 0
        %374 = vmatprep.mubr.bf16.mxu0 0
        %375 = vmatmul.mubr.bf16.gmra.mxu0 %v340
        %v376 = vpop.f32.mrf.mxu0
        %v377 = vadd.f32 0.0, %v376
        %v378 = vpop.f32.mrf.mxu0
        %v379 = vpop.f32.mrf.mxu0
        %v380 = vpop.f32.mrf.mxu0
        %381 = vdwg.mxu0
        %v382 = vld [vmem:[#allocation8] sm:$0xf]
        %v383 = vld [vmem:[#allocation8 + $0x4] sm:$0xf]
        %v384 = vld [vmem:[#allocation8 + $0x8] sm:$0xf]
        %v385 = vld [vmem:[#allocation8 + $0xc] sm:$0xf]
        %v390 = vunpack.c.l.b16 %v382
        %v391 = vunpack.c.l.b16 %v383
        %v392 = vunpack.c.l.b16 %v384
        %v393 = vunpack.c.l.b16 %v385
        %v394 = vpack.c.b16 %v391, %v390
        %v395 = vpack.c.b16 %v393, %v392
        %v399 = vsel %vm338, %v321, 0
        %401 = vmatprep.subr.bf16.mxu0 0
        %402 = vmatpush1.bf16.msra.mxu0 0
        %403 = vmatprep.subr.bf16.mxu0 0
        %404 = vmatpush1.bf16.msra.mxu0 0
        %405 = vmatprep.subr.bf16.mxu0 0
        %406 = vmatpush1.bf16.msra.mxu0 0
        %407 = vmatprep.subr.bf16.mxu0 0
        %408 = vmatpush1.bf16.msra.mxu0 0
        %409 = vmatprep.subr.bf16.mxu0 0
        %410 = vmatpush1.bf16.msra.mxu0 0
        %411 = vmatprep.subr.bf16.mxu0 0
        %412 = vmatpush1.bf16.msra.mxu0 0
        %413 = vmatprep.subr.bf16.mxu0 0
        %414 = vmatpush1.bf16.msra.mxu0 %v395
        %415 = vmatprep.subr.bf16.mxu0 0
        %416 = vmatpush1.bf16.msra.mxu0 %v394
        %417 = vmatprep.subr.bf16.mxu0 0
        %418 = vmatpush2.bf16.msra.mxu0 0
        %419 = vmatprep.subr.bf16.mxu0 0
        %420 = vmatpush2.bf16.msra.mxu0 0
        %421 = vmatprep.subr.bf16.mxu0 0
        %422 = vmatpush2.bf16.msra.mxu0 0
        %423 = vmatprep.subr.bf16.mxu0 0
        %424 = vmatpush2.bf16.msra.mxu0 0
        %425 = vmatprep.subr.bf16.mxu0 0
        %426 = vmatpush2.bf16.msra.mxu0 0
        %427 = vmatprep.subr.bf16.mxu0 0
        %428 = vmatpush2.bf16.msra.mxu0 0
        %429 = vmatprep.subr.bf16.mxu0 0
        %430 = vmatpush2.bf16.msra.mxu0 0
        %431 = vmatprep.subr.bf16.mxu0 0
        %432 = vmatpush2.bf16.msra.mxu0 0
        %433 = vmatprep.mubr.bf16.mxu0 0
        %434 = vmatmul.mubr.bf16.gmra.mxu0 %v399
        %v435 = vpop.f32.mrf.mxu0
        %v436 = vadd.f32 0.0, %v435
        %v437 = vpop.f32.mrf.mxu0
        %v438 = vpop.f32.mrf.mxu0
        %v439 = vpop.f32.mrf.mxu0
        %440 = vdwg.mxu0
        %v441 = vpack.c.bf16 %v377, %v377
        %vm442 = vcmask 257024
        %443 = vst.msk [vmem:[%s309] sm:$0xf] %vm442, %v441
        %v444 = vpack.c.bf16 %v436, %v436
        %445 = vst.msk [vmem:[%s316] sm:$0xf] %vm442, %v444
        %s446 = sand.u32 %s132, 1
        %s447 = scalar_lea.sflag [#allocation4], %s446
        %s448 = sand.u32 %s132, 1
        %s449 = smul.addr %s448, 4
        %s450 = scalar_lea.vmem [#allocation10], %s449
        %s451 = sand.u32 %s158, 1
        %s452 = scalar_lea.sflag [#allocation12], %s451
        %s453 = sand.u32 %s158, 1
        %s454 = smul.addr %s453, 4
        %s455 = scalar_lea.vmem [#allocation11], %s454
        // Predicated region
        $region53: #{tpu_custom_call.1} parent=35 // pred_check
          %p456 = pneg %p142
        $region54: #{tpu_custom_call.1} parent=35 // pred_check_branch
          %458 = sbr.rel (%p456) target = $region56
        $region55: #{tpu_custom_call.1} parent=35 // pred_region
          %s460 = ssub.s32 64, 64
          %461 = vsyncadd %s447, %s460
          %s462 = smul.addr %s30, 64
          %s463 = scalar_lea.hbm %s4, %s462
          %s465 = sshll.u32 %s450, 4
          %s466 = int_to_ptr.vmem [resolvable:$true] %s465
          %468 = dma.vmem_to_hbm [thread:$0]  %s466, 64, %s463, %s447
        $region56: #{tpu_custom_call.1} parent=35 // pred_fallthru
          _
        // Predicated region
        $region57: #{tpu_custom_call.1} parent=35 // pred_check
          %p469 = pneg %p168
        $region58: #{tpu_custom_call.1} parent=35 // pred_check_branch
          %471 = sbr.rel (%p469) target = $region60
        $region59: #{tpu_custom_call.1} parent=35 // pred_region
          %s473 = ssub.s32 64, 64
          %474 = vsyncadd %s452, %s473
          %s475 = smul.addr %s30, 64
          %s476 = scalar_lea.hbm %s5, %s475
          %s478 = sshll.u32 %s455, 4
          %s479 = int_to_ptr.vmem [resolvable:$true] %s478
          %481 = dma.vmem_to_hbm [thread:$0]  %s479, 64, %s476, %s452
        $region60: #{tpu_custom_call.1} parent=35 // pred_fallthru
          _
      $region36: #{tpu_custom_call.1} parent=5 // pred_fallthru
        _
      %p482 = scmp.le.s32.totalorder 2, %s25
      // Predicated region
      $region61: #{tpu_custom_call.1} parent=5 // pred_check
        %p483 = pneg %p482
      $region62: #{tpu_custom_call.1} parent=5 // pred_check_branch
        %485 = sbr.rel (%p483) target = $region64
      $region63: #{tpu_custom_call.1} parent=5 // pred_region
        %s486 = ssub.s32 %s25, 2
        // Predicated region
        $region65: #{tpu_custom_call.1} parent=63 // pred_check
          %p487 = pneg %p148
        $region66: #{tpu_custom_call.1} parent=63 // pred_check_branch
          %489 = sbr.rel (%p487) target = $region68
        $region67: #{tpu_custom_call.1} parent=63 // pred_region
          %s490 = sand.u32 %s133, 1
          %s491 = scalar_lea.sflag [#allocation4], %s490
          %s492 = sand.u32 %s133, 1
          %s493 = smul.addr %s492, 4
          %s494 = scalar_lea.vmem [#allocation10], %s493
          %495 = dma.done %s491, 64
        $region68: #{tpu_custom_call.1} parent=63 // pred_fallthru
          _
        // Predicated region
        $region69: #{tpu_custom_call.1} parent=63 // pred_check
          %p496 = pneg %p174
        $region70: #{tpu_custom_call.1} parent=63 // pred_check_branch
          %498 = sbr.rel (%p496) target = $region72
        $region71: #{tpu_custom_call.1} parent=63 // pred_region
          %s499 = sand.u32 %s159, 1
          %s500 = scalar_lea.sflag [#allocation12], %s499
          %s501 = sand.u32 %s159, 1
          %s502 = smul.addr %s501, 4
          %s503 = scalar_lea.vmem [#allocation11], %s502
          %504 = dma.done %s500, 64
        $region72: #{tpu_custom_call.1} parent=63 // pred_fallthru
          _
      $region64: #{tpu_custom_call.1} parent=5 // pred_fallthru
        _
    $region6: #{tpu_custom_call.1} parent=1 // loop_footer
      %s29 = sadd.s32 1, %s25
    $region7: #{tpu_custom_call.1} parent=1 // loop_footer_branch
      %24 = sbr.rel target = $region3
    $region8: #{tpu_custom_call.1} parent=1 // loop_exit
      _
    %505 = vsyncpa [#allocation3], 1
    %s506 = scalar_lea.sflag [#allocation3], 1
    %507 = vsyncpa %s506, 1
    %508 = vsyncpa [#allocation6], 1
    %s509 = scalar_lea.sflag [#allocation6], 1
    %510 = vsyncpa %s509, 1
    %511 = vsyncpa [#allocation9], 1
    %512 = vsyncpa [#allocation4], 1
    %s513 = scalar_lea.sflag [#allocation4], 1
    %514 = vsyncpa %s513, 1
    %515 = vsyncpa [#allocation12], 1
    %s516 = scalar_lea.sflag [#allocation12], 1
    %517 = vsyncpa %s516, 1

</llo_original>
